<compile_context>
chip_gen: v7x
topology: tpu7x:2x2x1
jax: 0.10.0
libtpu: 0.0.40
codegen_flags: <defaults>
</compile_context>

<pallas_src>
import functools

import jax
import jax.numpy as jnp
from jax import lax
from jax.experimental import pallas as pl
from jax.experimental.pallas import tpu as pltpu


# ---------------------------------------------------------------------------
# Interpolation-matrix construction (glue, plain JAX)
# ---------------------------------------------------------------------------
def _interp_matrix(n_in: int, n_out: int) -> jnp.ndarray:
    """Row-stochastic W (n_out, n_in): W @ v resamples v, align_corners=True."""
    if n_in == 1:
        return jnp.ones((n_out, 1), dtype=jnp.float32)
    if n_out == 1:
        coords = jnp.zeros((1,), dtype=jnp.float32)
    else:
        coords = jnp.arange(n_out, dtype=jnp.float32) * ((n_in - 1) / (n_out - 1))
    lo = jnp.clip(jnp.floor(coords).astype(jnp.int32), 0, n_in - 2)
    frac = coords - lo.astype(jnp.float32)
    rows = jnp.arange(n_out)
    w = jnp.zeros((n_out, n_in), dtype=jnp.float32)
    w = w.at[rows, lo].add(1.0 - frac)
    w = w.at[rows, lo + 1].add(frac)
    return w


# ---------------------------------------------------------------------------
# Pallas kernel: width pass = flat 2-D matmul, height pass = batched matmul
# ---------------------------------------------------------------------------
def _upscale_kernel(wy_ref, wxt_ref, x_ref, o_ref):
    b, h, w = x_ref.shape
    h_out = wy_ref.shape[0]
    w_out = wxt_ref.shape[1]
    cdt = wxt_ref.dtype                       # compute dtype (f32, or bf16 for bf16 I/O)

    # ---- width pass: all B images folded into one 2-D MXU matmul ----
    x2 = x_ref[...].reshape(b * h, w).astype(cdt)              # (B*H, W)
    u = jnp.dot(x2, wxt_ref[...], preferred_element_type=jnp.float32)  # (B*H, W_out) f32
    u = u.reshape(b, h, w_out).astype(cdt)                     # (B, H, W_out)

    # ---- height pass: batched matmul over the B images ----
    wy_b = jnp.broadcast_to(wy_ref[...], (b, h_out, h))        # (B, H_out, H)
    y = lax.dot_general(
        wy_b, u,
        dimension_numbers=(((2,), (1,)), ((0,), (0,))),
        preferred_element_type=jnp.float32)                    # (B, H_out, W_out) f32

    o_ref[...] = y.astype(o_ref.dtype)


# ---------------------------------------------------------------------------
# Block-size selection (generation-aware VMEM budget, >= 2 grid steps)
# ---------------------------------------------------------------------------
def _block_vmem_bytes(b: int, h: int, w: int, s: int, itemsize: int) -> int:
    h_out, w_out = h * s, w * s
    io = 2 * b * (h * w + h_out * w_out) * itemsize            # double-buffered I/O blocks
    interm = b * (h * w_out + h_out * h + h_out * w_out) * 4   # u + wy broadcast + f32 result
    weights = 2 * (h_out * h + w * w_out) * 4                  # tiny, double-buffered
    return io + interm + weights


def _pick_images_per_block(nc: int, h: int, w: int, s: int,
                           itemsize: int, vmem_budget: int) -> int:
    """Images per grid step: divisor of NC (no padding), VMEM-bounded,
    MiB-scale payload per step, and >= 2 grid steps whenever NC >= 2."""
    h_out, w_out = h * s, w * s
    per_image_payload = (h * w + h_out * w_out) * itemsize
    target_payload = 2 << 20                                   # ~knee of HBM roofline

    divs = [d for d in range(1, min(nc, 4096) + 1) if nc % d == 0]
    feasible = [d for d in divs
                if _block_vmem_bytes(d, h, w, s, itemsize) <= vmem_budget]
    if not feasible:
        return 1                                               # huge image: single-image block
    multi = [d for d in feasible if nc // d >= 2]              # keep both v7x TCs busy
    if not multi:
        return max(feasible)
    reaching = [d for d in multi if d * per_image_payload >= target_payload]
    return min(reaching) if reaching else max(multi)


# ---------------------------------------------------------------------------
# Wrapper
# ---------------------------------------------------------------------------
@functools.partial(jax.jit, static_argnames=("s",))
def upscale(x: jnp.ndarray, s: int = 2) -> jnp.ndarray:
    """Bilinear upsample NCHW tensor by integer factor s (align_corners=True)."""
    n, c, h, w = x.shape
    h_out, w_out = h * s, w * s
    nc = n * c
    itemsize = x.dtype.itemsize

    # Generation-aware VMEM budget (v5e/v6e: 128 MiB, v7x: 64 MiB per TC).
    try:
        vmem_cap = int(pltpu.get_tpu_info().vmem_capacity_bytes)
    except Exception:
        vmem_cap = 64 * 1024 * 1024
    budget = min(max(vmem_cap // 5, 4 << 20), 28 << 20)

    b = _pick_images_per_block(nc, h, w, s, itemsize, budget)
    steps = nc // b

    # Interpolation operators; bf16 weights for bf16 I/O (native MXU path).
    compute_dtype = jnp.bfloat16 if x.dtype == jnp.bfloat16 else jnp.float32
    wy = _interp_matrix(h, h_out).astype(compute_dtype)        # (H_out, H)
    wxt = _interp_matrix(w, w_out).T.astype(compute_dtype)     # (W, W_out)

    x3 = x.reshape(nc, h, w)                                   # free view, NCHW contiguous

    needed = _block_vmem_bytes(b, h, w, s, itemsize)
    vmem_limit = int(min(vmem_cap * 3 // 4,
                         max(32 << 20, needed * 3 // 2 + (8 << 20))))

    flops = 2 * nc * (h * w * w_out + h * h_out * w_out)
    bytes_accessed = (nc * (h * w + h_out * w_out) * itemsize
                      + (h_out * h + w * w_out) * jnp.dtype(compute_dtype).itemsize)

    out3 = pl.pallas_call(
        _upscale_kernel,
        out_shape=jax.ShapeDtypeStruct((nc, h_out, w_out), x.dtype),
        grid_spec=pltpu.PrefetchScalarGridSpec(
            num_scalar_prefetch=0,
            grid=(steps,),
            in_specs=[
                pl.BlockSpec((h_out, h), lambda i: (0, 0)),      # Wy (grid-invariant, tiny)
                pl.BlockSpec((w, w_out), lambda i: (0, 0)),      # Wx^T (grid-invariant, tiny)
                pl.BlockSpec((b, h, w), lambda i: (i, 0, 0)),    # B images, contiguous DMA
            ],
            out_specs=pl.BlockSpec((b, h_out, w_out), lambda i: (i, 0, 0)),
        ),
        compiler_params=pltpu.CompilerParams(
            dimension_semantics=("parallel",),
            vmem_limit_bytes=vmem_limit,
        ),
        cost_estimate=pl.CostEstimate(
            flops=int(flops),
            transcendentals=0,
            bytes_accessed=int(bytes_accessed),
        ),
    )(wy, wxt, x3)

    return out3.reshape(n, c, h_out, w_out)                    # free view back to NCHW


# ---------------------------------------------------------------------------
# Independent (gather-based) reference for verification
# ---------------------------------------------------------------------------
def _reference_upscale(x: jnp.ndarray, s: int = 2) -> jnp.ndarray:
    n, c, h, w = x.shape
    h_out, w_out = h * s, w * s

    def coords(n_in, n_out):
        if n_out == 1 or n_in == 1:
            return (jnp.zeros((n_out,), jnp.int32),
                    jnp.zeros((n_out,), jnp.int32),
                    jnp.zeros((n_out,), jnp.float32))
        cc = jnp.arange(n_out, dtype=jnp.float32) * ((n_in - 1) / (n_out - 1))
        lo = jnp.clip(jnp.floor(cc).astype(jnp.int32), 0, n_in - 2)
        return lo, lo + 1, cc - lo.astype(jnp.float32)

    ylo, yhi, yf = coords(h, h_out)
    xlo, xhi, xf = coords(w, w_out)

    top = x[:, :, ylo, :]
    bot = x[:, :, yhi, :]
    rows = top * (1.0 - yf)[None, None, :, None] + bot * yf[None, None, :, None]
    left = rows[:, :, :, xlo]
    right = rows[:, :, :, xhi]
    return left * (1.0 - xf) + right * xf


if __name__ == "__main__":
    key = jax.random.PRNGKey(0)
    x = jax.random.normal(key, (2, 4, 16, 16), dtype=jnp.float32)

    out = jax.block_until_ready(upscale(x, s=2))

    assert out.shape == (2, 4, 32, 32), out.shape
    ref = _reference_upscale(x, s=2)
    err = float(jnp.max(jnp.abs(out - ref)))
    assert err < 1e-4, f"max abs error {err}"

    print("KERNEL_OK")
</pallas_src>

<mosaic_0001>
module attributes {stable_mosaic.version = 11 : i64} {
  func.func private @main(%arg0: i32) attributes {dimension_semantics = [#tpu.dimension_semantics<core_parallel>], iteration_bounds = array<i64: 2>, tpu.core_type = #tpu.core_type<sc_scalar_subcore>, window_params = []} {
    return
  }
}

module attributes {stable_mosaic.version = 11 : i64} {
  func.func private @main(%arg0: i32) attributes {dimension_semantics = [#tpu.dimension_semantics<core_parallel>], iteration_bounds = array<i64: 2>, tpu.core_type = #tpu.core_type<sc_scalar_subcore>, window_params = []} {
    return
  }
}

module attributes {stable_mosaic.version = 11 : i64} {
  func.func @_upscale_kernel(%arg0: i32, %arg1: memref<32x16xf32, #tpu.memory_space<vmem>>, %arg2: memref<16x32xf32, #tpu.memory_space<vmem>>, %arg3: memref<4x16x16xf32, #tpu.memory_space<vmem>>, %arg4: memref<4x32x32xf32, #tpu.memory_space<vmem>>) attributes {dimension_semantics = [#tpu.dimension_semantics<parallel>], iteration_bounds = array<i64: 2>, scalar_prefetch = 0 : i64, scratch_operands = 0 : i64, tpu.core_type = #tpu.core_type<tc>, window_params = [{pipeline_mode = #tpu.pipeline_mode<synchronous>, transform_indices = @transform_0, window_bounds = array<i64: 32, 16>}, {pipeline_mode = #tpu.pipeline_mode<synchronous>, transform_indices = @transform_1, window_bounds = array<i64: 16, 32>}, {transform_indices = @transform_2, window_bounds = array<i64: 4, 16, 16>}, {transform_indices = @transform_3, window_bounds = array<i64: 4, 32, 32>}]} {
    %c0 = arith.constant 0 : index
    %c0_0 = arith.constant 0 : index
    %c0_1 = arith.constant 0 : index
    %0 = vector.load %arg3[%c0, %c0_0, %c0_1] : memref<4x16x16xf32, #tpu.memory_space<vmem>>, vector<4x16x16xf32>
    %1 = vector.shape_cast %0 : vector<4x16x16xf32> to vector<64x16xf32>
    %c0_2 = arith.constant 0 : index
    %c0_3 = arith.constant 0 : index
    %2 = vector.load %arg2[%c0_2, %c0_3] : memref<16x32xf32, #tpu.memory_space<vmem>>, vector<16x32xf32>
    %cst = arith.constant dense<0.000000e+00> : vector<64x32xf32>
    %3 = tpu.matmul %1, %2, %cst {dimension_numbers = #tpu.dot_dimension_numbers<[1], [0], [0], [1], [0, 0, 1, 1], [], []>} : vector<64x16xf32>, vector<16x32xf32>, vector<64x32xf32> -> vector<64x32xf32>
    %4 = vector.shape_cast %3 : vector<64x32xf32> to vector<4x16x32xf32>
    %c0_4 = arith.constant 0 : index
    %c0_5 = arith.constant 0 : index
    %5 = vector.load %arg1[%c0_4, %c0_5] : memref<32x16xf32, #tpu.memory_space<vmem>>, vector<32x16xf32>
    %6 = vector.shape_cast %5 : vector<32x16xf32> to vector<1x32x16xf32>
    %7 = vector.broadcast %6 : vector<1x32x16xf32> to vector<4x32x16xf32>
    %cst_6 = arith.constant dense<0.000000e+00> : vector<4x32x32xf32>
    %8 = tpu.matmul %7, %4, %cst_6 {dimension_numbers = #tpu.dot_dimension_numbers<[2], [1], [1], [2], [0, 0, 0, 1, 1, 2], [0], [0]>} : vector<4x32x16xf32>, vector<4x16x32xf32>, vector<4x32x32xf32> -> vector<4x32x32xf32>
    %c0_7 = arith.constant 0 : index
    %c0_8 = arith.constant 0 : index
    %c0_9 = arith.constant 0 : index
    %9 = vector.load %arg4[%c0_7, %c0_8, %c0_9] : memref<4x32x32xf32, #tpu.memory_space<vmem>>, vector<4x32x32xf32>
    tpu.vector_store %arg4[%c0_7, %c0_8, %c0_9], %8 {strides = array<i32>} : memref<4x32x32xf32, #tpu.memory_space<vmem>>, vector<4x32x32xf32>,
    return
  }
  func.func @transform_0(%arg0: i32) -> (i32, i32) {
    %c0_i32 = arith.constant 0 : i32
    %c0_i32_0 = arith.constant 0 : i32
    %c0_i32_1 = arith.constant 0 : i32
    return %c0_i32, %c0_i32_0 : i32, i32
  }
  func.func @transform_1(%arg0: i32) -> (i32, i32) {
    %c0_i32 = arith.constant 0 : i32
    %c0_i32_0 = arith.constant 0 : i32
    %c0_i32_1 = arith.constant 0 : i32
    return %c0_i32, %c0_i32_0 : i32, i32
  }
  func.func @transform_2(%arg0: i32) -> (i32, i32, i32) {
    %c0_i32 = arith.constant 0 : i32
    %c0_i32_0 = arith.constant 0 : i32
    %c0_i32_1 = arith.constant 0 : i32
    return %arg0, %c0_i32, %c0_i32_0 : i32, i32, i32
  }
  func.func @transform_3(%arg0: i32) -> (i32, i32, i32) {
    %c0_i32 = arith.constant 0 : i32
    %c0_i32_0 = arith.constant 0 : i32
    %c0_i32_1 = arith.constant 0 : i32
    return %arg0, %c0_i32, %c0_i32_0 : i32, i32, i32
  }
}

</mosaic_0001>

<llo_original>
// kernel: upscale.1
$region0: #{upscale.1}
  #allocation0 [shape = 'u32[]', space=smem, size = 0x4, offset = 0x4, fixed_abs, tag = 'smem constant byte address 0x4 - core index']
  #allocation1 [shape = 'u32[144,128]{1,0:T(1,128)}', space=vmem, size = 0x12000, scoped, tag = 'internal scratch']
  %s0 = inlined_call_operand.vmem [shape: f32[32,16], index: 0, kind: input, shape index: {}]
  %s1 = inlined_call_operand.vmem [shape: f32[16,32], index: 1, kind: input, shape index: {}]
  %s2 = inlined_call_operand.vmem [shape: f32[8,16,16], index: 2, kind: input, shape index: {}]
  %s3 = inlined_call_operand.hbm [shape: f32[8,32,32], index: 3, kind: output, shape index: {}]
  %s4 = sld [smem:[#allocation0]]
  $region45: #{upscale.1} parent=0
    _
  %s6 = ssub.s32 1, %s4
  %s7 = scalar_select 0, %s6, %s4
  $region1: #{upscale.1} parent=0
    #allocation2 [shape = 'u8[131072]{0}', space=vmem, size = 0x20000, scoped, tag = 'output window, operand 0']
    #allocation3 [shape = 's32[2]{0}', space=sflag, size = 0x8, scoped, tag = 'scoped memory for upscale.1']
    %8 = vsyncpa [#allocation3], 0
    %s9 = scalar_lea.sflag [#allocation3], 1
    %10 = vsyncpa %s9, 0
    loop: start=0, step=1, limit=4
    $region2: #{upscale.1} parent=1 // loop_pre_header
      _
    $region3: #{upscale.1} parent=1 // loop_header
      %s12 = sphi 0, %s16
      %p13 = scmp.ge.s32.totalorder %s12, 4
      %s20 = sphi 0, %s20
      %s22 = sphi 0, %s20
      %s23 = sphi 0, %s22
      %s37 = sphi 0, %s23
      %s41 = sphi 0, %s41
      %s43 = sphi 0, %s41
      %s44 = sphi 0, %s43
      %s58 = sphi 0, %s44
      %s64 = sphi 0, %s66
      %s67 = sphi 0, %s64
      %s68 = sphi 0, %s67
      %s84 = sphi 0, %s68
      %s90 = sphi 0, %s92
      %s93 = sphi 0, %s90
      %s94 = sphi 0, %s93
      %s110 = sphi 0, %s94
    $region4: #{upscale.1} parent=1 // loop_header_branch
      %15 = sbr.rel (%p13) target = $region8
    $region5: #{upscale.1} parent=1 // loop_body
      %s17 = ssub.s32 %s12, 1
      %s18 = ssub.s32 %s12, 2
      %s19 = sadd.s32 %s12, 1
      %s21 = sadd.s32 %s20, 1
      %p24 = scmp.eq.s32.totalorder %s12, 1
      %p25 = scmp.ne.s32.totalorder %s20, %s22
      %p26 = scmp.eq.s32.totalorder %s12, 0
      %p27 = por %p25, %p26
      %p28 = scmp.ne.s32.totalorder %s20, %s22
      %p29 = scmp.eq.s32.totalorder %s17, 1
      %p30 = por %p28, %p29
      %p31 = scmp.ne.s32.totalorder %s22, %s23
      %p32 = scmp.eq.s32.totalorder %s17, 0
      %p33 = por %p31, %p32
      %p34 = scmp.ne.s32.totalorder %s22, %s23
      %p35 = scmp.eq.s32.totalorder %s18, 1
      %p36 = por %p34, %p35
      %p38 = scmp.ne.s32.totalorder %s23, %s37
      %p39 = scmp.eq.s32.totalorder %s18, 0
      %p40 = por %p38, %p39
      %s42 = sadd.s32 %s41, 1
      %p45 = scmp.eq.s32.totalorder %s12, 1
      %p46 = scmp.ne.s32.totalorder %s41, %s43
      %p47 = scmp.eq.s32.totalorder %s12, 0
      %p48 = por %p46, %p47
      %p49 = scmp.ne.s32.totalorder %s41, %s43
      %p50 = scmp.eq.s32.totalorder %s17, 1
      %p51 = por %p49, %p50
      %p52 = scmp.ne.s32.totalorder %s43, %s44
      %p53 = scmp.eq.s32.totalorder %s17, 0
      %p54 = por %p52, %p53
      %p55 = scmp.ne.s32.totalorder %s43, %s44
      %p56 = scmp.eq.s32.totalorder %s18, 1
      %p57 = por %p55, %p56
      %p59 = scmp.ne.s32.totalorder %s44, %s58
      %p60 = scmp.eq.s32.totalorder %s18, 0
      %p61 = por %p59, %p60
      %s62 = ssub.s32 %s12, %s19
      %p63 = scmp.eq.s32.totalorder %s62, 0
      %s65 = sadd.s32 %s64, 1
      %s66 = scalar_select %p63, %s64, %s65
      %p69 = pneg %p63
      %p70 = scmp.eq.s32.totalorder %s12, 1
      %p71 = por %p69, %p70
      %p72 = scmp.ne.s32.totalorder %s64, %s67
      %p73 = scmp.eq.s32.totalorder %s12, 0
      %p74 = por %p72, %p73
      %p75 = scmp.ne.s32.totalorder %s64, %s67
      %p76 = scmp.eq.s32.totalorder %s17, 1
      %p77 = por %p75, %p76
      %p78 = scmp.ne.s32.totalorder %s67, %s68
      %p79 = scmp.eq.s32.totalorder %s17, 0
      %p80 = por %p78, %p79
      %p81 = scmp.ne.s32.totalorder %s67, %s68
      %p82 = scmp.eq.s32.totalorder %s18, 1
      %p83 = por %p81, %p82
      %p85 = scmp.ne.s32.totalorder %s68, %s84
      %p86 = scmp.eq.s32.totalorder %s18, 0
      %p87 = por %p85, %p86
      %s88 = ssub.s32 %s12, %s19
      %p89 = scmp.eq.s32.totalorder %s88, 0
      %s91 = sadd.s32 %s90, 1
      %s92 = scalar_select %p89, %s90, %s91
      %p95 = pneg %p89
      %p96 = scmp.eq.s32.totalorder %s12, 1
      %p97 = por %p95, %p96
      %p98 = scmp.ne.s32.totalorder %s90, %s93
      %p99 = scmp.eq.s32.totalorder %s12, 0
      %p100 = por %p98, %p99
      %p101 = scmp.ne.s32.totalorder %s90, %s93
      %p102 = scmp.eq.s32.totalorder %s17, 1
      %p103 = por %p101, %p102
      %p104 = scmp.ne.s32.totalorder %s93, %s94
      %p105 = scmp.eq.s32.totalorder %s17, 0
      %p106 = por %p104, %p105
      %p107 = scmp.ne.s32.totalorder %s93, %s94
      %p108 = scmp.eq.s32.totalorder %s18, 1
      %p109 = por %p107, %p108
      %p111 = scmp.ne.s32.totalorder %s94, %s110
      %p112 = scmp.eq.s32.totalorder %s18, 0
      %p113 = por %p111, %p112
      %p114 = scmp.le.s32.totalorder 1, %s12
      %p115 = scmp.lt.s32.totalorder %s12, 3
      %p116 = pnand %p114, %p115
      %p117 = pneg %p116
      // Predicated region
      $region9: #{upscale.1} parent=5 // pred_check
        _
      $region10: #{upscale.1} parent=5 // pred_check_branch
        %119 = sbr.rel (%p116) target = $region12
      $region11: #{upscale.1} parent=5 // pred_region
        %s120 = ssub.s32 %s12, 1
        // Predicated region
        $region13: #{upscale.1} parent=11 // pred_check
          %p121 = pneg %p33
        $region14: #{upscale.1} parent=11 // pred_check_branch
          %123 = sbr.rel (%p121) target = $region16
        $region15: #{upscale.1} parent=11 // pred_region
          _
        $region16: #{upscale.1} parent=11 // pred_fallthru
          _
        // Predicated region
        $region17: #{upscale.1} parent=11 // pred_check
          %p124 = pneg %p54
        $region18: #{upscale.1} parent=11 // pred_check_branch
          %126 = sbr.rel (%p124) target = $region20
        $region19: #{upscale.1} parent=11 // pred_region
          _
        $region20: #{upscale.1} parent=11 // pred_fallthru
          _
      $region12: #{upscale.1} parent=5 // pred_fallthru
        _
      %p127 = scmp.lt.s32.totalorder %s12, 2
      // Predicated region
      $region21: #{upscale.1} parent=5 // pred_check
        %p128 = pneg %p127
      $region22: #{upscale.1} parent=5 // pred_check_branch
        %130 = sbr.rel (%p128) target = $region24
      $region23: #{upscale.1} parent=5 // pred_region
        // Predicated region
        $region25: #{upscale.1} parent=23 // pred_check
          %p131 = pneg %p74
        $region26: #{upscale.1} parent=23 // pred_check_branch
          %133 = sbr.rel (%p131) target = $region28
        $region27: #{upscale.1} parent=23 // pred_region
          %s134 = smul.u32 4, %s12
          %p135 = scmp.lt.s32.totalorder %s134, 7
          %s136 = scalar_select %p135, %s134, 7
          %s137 = smul.addr %s136, 2
          %s138 = smul.addr %s137, 8
          %s139 = scalar_lea.vmem %s2, %s138
          %s140 = smul.u32 4, %s12
        $region28: #{upscale.1} parent=23 // pred_fallthru
          _
      $region24: #{upscale.1} parent=5 // pred_fallthru
        _
      %p141 = scmp.le.s32.totalorder 1, %s12
      %p142 = scmp.lt.s32.totalorder %s12, 3
      %p143 = pnand %p141, %p142
      %p144 = pneg %p143
      // Predicated region
      $region29: #{upscale.1} parent=5 // pred_check
        _
      $region30: #{upscale.1} parent=5 // pred_check_branch
        %146 = sbr.rel (%p143) target = $region32
      $region31: #{upscale.1} parent=5 // pred_region
        %s147 = ssub.s32 %s12, 1
        %p148 = pneg %p33
        %p149 = pneg %p30
        %p150 = pneg %p54
        %p151 = pneg %p51
        %s152 = smul.u32 4, %s17
        %p153 = scmp.lt.s32.totalorder %s152, 7
        %s154 = scalar_select %p153, %s152, 7
        %s155 = smul.addr %s154, 2
        %s156 = smul.addr %s155, 8
        %s157 = scalar_lea.vmem %s2, %s156
        %p158 = pneg %p80
        %p159 = pneg %p77
        %p160 = pneg %p106
        %p161 = pneg %p103
        %s162 = sand.u32 %s93, 1
        %s163 = scalar_lea.sflag [#allocation3], %s162
        %s164 = sand.u32 %s93, 1
        %s165 = smul.addr %s164, 128
        %s166 = scalar_lea.vmem [#allocation2], %s165
        %s167 = smul.u32 4, %s17
        %p168 = scmp.lt.s32.totalorder %s167, 7
        %s169 = scalar_select %p168, %s167, 7
        %s170 = smul.addr %s169, 2
        %s171 = smul.addr %s170, 8
        %s172 = scalar_lea.vmem %s2, %s171
        %s173 = smul.u32 4, %s17
        %s174 = smul.u32 4, %s17
        %v175 = vld [vmem:[%s172] sm:$0xff]
        %v176 = vld [vmem:[%s172 + $0x8] sm:$0xff]
        %v177 = vld [vmem:[%s172 + $0x10] sm:$0xff]
        %v178 = vld [vmem:[%s172 + $0x18] sm:$0xff]
        %v179 = vld [vmem:[%s172 + $0x20] sm:$0xff]
        %v180 = vld [vmem:[%s172 + $0x28] sm:$0xff]
        %v181 = vld [vmem:[%s172 + $0x30] sm:$0xff]
        %v182 = vld [vmem:[%s172 + $0x38] sm:$0xff]
        %v183 = vld [vmem:[%s1] sm:$0xff]
        %v184 = vld [vmem:[%s1 + $0x8] sm:$0xff]
        %vm185 = vcmask 130048
        %v187 = vsel %vm185, %v175, 0
        %v190 = vsel %vm185, %v176, 0
        %v193 = vsel %vm185, %v177, 0
        %v196 = vsel %vm185, %v178, 0
        %v199 = vsel %vm185, %v179, 0
        %v202 = vsel %vm185, %v180, 0
        %v205 = vsel %vm185, %v181, 0
        %v208 = vsel %vm185, %v182, 0
        %210 = vmatprep.subr.mxu0 0.0
        %211 = vmatpush1.msra.mxu0 %v183
        %212 = vmatprep.subr.mxu0 0.0
        %213 = vmatpush1.msra.mxu0 %v184
        %214 = vmatprep.subr.mxu0 0.0
        %215 = vmatpush1.msra.mxu0 0.0
        %216 = vmatprep.subr.mxu0 0.0
        %217 = vmatpush1.msra.mxu0 0.0
        %218 = vmatprep.subr.mxu0 0.0
        %219 = vmatpush1.msra.mxu0 0.0
        %220 = vmatprep.subr.mxu0 0.0
        %221 = vmatpush1.msra.mxu0 0.0
        %222 = vmatprep.subr.mxu0 0.0
        %223 = vmatpush1.msra.mxu0 0.0
        %224 = vmatprep.subr.mxu0 0.0
        %225 = vmatpush1.msra.mxu0 0.0
        %226 = vmatprep.subr.mxu0 0.0
        %227 = vmatpush1.msra.mxu0 0.0
        %228 = vmatprep.subr.mxu0 0.0
        %229 = vmatpush1.msra.mxu0 0.0
        %230 = vmatprep.subr.mxu0 0.0
        %231 = vmatpush1.msra.mxu0 0.0
        %232 = vmatprep.subr.mxu0 0.0
        %233 = vmatpush1.msra.mxu0 0.0
        %234 = vmatprep.subr.mxu0 0.0
        %235 = vmatpush1.msra.mxu0 0.0
        %236 = vmatprep.subr.mxu0 0.0
        %237 = vmatpush1.msra.mxu0 0.0
        %238 = vmatprep.subr.mxu0 0.0
        %239 = vmatpush1.msra.mxu0 0.0
        %240 = vmatprep.subr.mxu0 0.0
        %241 = vmatpush1.msra.mxu0 0.0
        %242 = vmatprep.subr.mxu0 0.0
        %243 = vmatpush1.msra.mxu0 0.0
        %244 = vmatprep.subr.mxu0 0.0
        %245 = vmatpush1.msra.mxu0 0.0
        %246 = vmatprep.subr.mxu0 0.0
        %247 = vmatpush1.msra.mxu0 0.0
        %248 = vmatprep.subr.mxu0 0.0
        %249 = vmatpush1.msra.mxu0 0.0
        %250 = vmatprep.subr.mxu0 0.0
        %251 = vmatpush1.msra.mxu0 0.0
        %252 = vmatprep.subr.mxu0 0.0
        %253 = vmatpush1.msra.mxu0 0.0
        %254 = vmatprep.subr.mxu0 0.0
        %255 = vmatpush1.msra.mxu0 0.0
        %256 = vmatprep.subr.mxu0 0.0
        %257 = vmatpush1.msra.mxu0 0.0
        %258 = vmatprep.subr.mxu0 0.0
        %259 = vmatpush1.msra.mxu0 0.0
        %260 = vmatprep.subr.mxu0 0.0
        %261 = vmatpush1.msra.mxu0 0.0
        %262 = vmatprep.subr.mxu0 0.0
        %263 = vmatpush1.msra.mxu0 0.0
        %264 = vmatprep.subr.mxu0 0.0
        %265 = vmatpush1.msra.mxu0 0.0
        %266 = vmatprep.subr.mxu0 0.0
        %267 = vmatpush1.msra.mxu0 0.0
        %268 = vmatprep.subr.mxu0 0.0
        %269 = vmatpush1.msra.mxu0 0.0
        %270 = vmatprep.subr.mxu0 0.0
        %271 = vmatpush1.msra.mxu0 0.0
        %272 = vmatprep.subr.mxu0 0.0
        %273 = vmatpush1.msra.mxu0 0.0
        %274 = vmatprep.mubr.f32.mxu0 0.0
        %275 = vmatmul.mubr.f32.gmra.mrb[0].mxu0 %v187
        %v276 = vpop.f32.mrb[0].mxu0
        %v277 = vadd.f32 0.0, %v276
        %v278 = vpop.f32.mrb[0].mxu0
        %279 = vmatprep.mubr.f32.mxu0 0.0
        %280 = vmatmul.mubr.f32.gmra.mrb[0].mxu0 %v190
        %v281 = vpop.f32.mrb[0].mxu0
        %v282 = vadd.f32 0.0, %v281
        %v283 = vpop.f32.mrb[0].mxu0
        %284 = vmatprep.mubr.f32.mxu0 0.0
        %285 = vmatmul.mubr.f32.gmra.mrb[0].mxu0 %v193
        %v286 = vpop.f32.mrb[0].mxu0
        %v287 = vadd.f32 0.0, %v286
        %v288 = vpop.f32.mrb[0].mxu0
        %289 = vmatprep.mubr.f32.mxu0 0.0
        %290 = vmatmul.mubr.f32.gmra.mrb[0].mxu0 %v196
        %v291 = vpop.f32.mrb[0].mxu0
        %v292 = vadd.f32 0.0, %v291
        %v293 = vpop.f32.mrb[0].mxu0
        %294 = vmatprep.mubr.f32.mxu0 0.0
        %295 = vmatmul.mubr.f32.gmra.mrb[0].mxu0 %v199
        %v296 = vpop.f32.mrb[0].mxu0
        %v297 = vadd.f32 0.0, %v296
        %v298 = vpop.f32.mrb[0].mxu0
        %299 = vmatprep.mubr.f32.mxu0 0.0
        %300 = vmatmul.mubr.f32.gmra.mrb[0].mxu0 %v202
        %v301 = vpop.f32.mrb[0].mxu0
        %v302 = vadd.f32 0.0, %v301
        %v303 = vpop.f32.mrb[0].mxu0
        %304 = vmatprep.mubr.f32.mxu0 0.0
        %305 = vmatmul.mubr.f32.gmra.mrb[0].mxu0 %v205
        %v306 = vpop.f32.mrb[0].mxu0
        %v307 = vadd.f32 0.0, %v306
        %v308 = vpop.f32.mrb[0].mxu0
        %309 = vmatprep.mubr.f32.mxu0 0.0
        %310 = vmatmul.mubr.f32.gmra.mrb[0].mxu0 %v208
        %v311 = vpop.f32.mrb[0].mxu0
        %v312 = vadd.f32 0.0, %v311
        %v313 = vpop.f32.mrb[0].mxu0
        %314 = vdwg.mxu0
        %v315 = vld [vmem:[%s0] sm:$0xff]
        %v316 = vld [vmem:[%s0 + $0x8] sm:$0xff]
        %v317 = vld [vmem:[%s0 + $0x10] sm:$0xff]
        %v318 = vld [vmem:[%s0 + $0x18] sm:$0xff]
        %v320 = vsel %vm185, %v315, 0
        %v323 = vsel %vm185, %v316, 0
        %v326 = vsel %vm185, %v317, 0
        %v329 = vsel %vm185, %v318, 0
        %331 = vmatprep.subr.mxu0 0.0
        %332 = vmatpush1.msra.mxu0 %v277
        %333 = vmatprep.subr.mxu0 0.0
        %334 = vmatpush1.msra.mxu0 %v282
        %335 = vmatprep.subr.mxu0 0.0
        %336 = vmatpush1.msra.mxu0 0.0
        %337 = vmatprep.subr.mxu0 0.0
        %338 = vmatpush1.msra.mxu0 0.0
        %339 = vmatprep.subr.mxu0 0.0
        %340 = vmatpush1.msra.mxu0 0.0
        %341 = vmatprep.subr.mxu0 0.0
        %342 = vmatpush1.msra.mxu0 0.0
        %343 = vmatprep.subr.mxu0 0.0
        %344 = vmatpush1.msra.mxu0 0.0
        %345 = vmatprep.subr.mxu0 0.0
        %346 = vmatpush1.msra.mxu0 0.0
        %347 = vmatprep.subr.mxu0 0.0
        %348 = vmatpush1.msra.mxu0 0.0
        %349 = vmatprep.subr.mxu0 0.0
        %350 = vmatpush1.msra.mxu0 0.0
        %351 = vmatprep.subr.mxu0 0.0
        %352 = vmatpush1.msra.mxu0 0.0
        %353 = vmatprep.subr.mxu0 0.0
        %354 = vmatpush1.msra.mxu0 0.0
        %355 = vmatprep.subr.mxu0 0.0
        %356 = vmatpush1.msra.mxu0 0.0
        %357 = vmatprep.subr.mxu0 0.0
        %358 = vmatpush1.msra.mxu0 0.0
        %359 = vmatprep.subr.mxu0 0.0
        %360 = vmatpush1.msra.mxu0 0.0
        %361 = vmatprep.subr.mxu0 0.0
        %362 = vmatpush1.msra.mxu0 0.0
        %363 = vmatprep.subr.mxu0 0.0
        %364 = vmatpush1.msra.mxu0 0.0
        %365 = vmatprep.subr.mxu0 0.0
        %366 = vmatpush1.msra.mxu0 0.0
        %367 = vmatprep.subr.mxu0 0.0
        %368 = vmatpush1.msra.mxu0 0.0
        %369 = vmatprep.subr.mxu0 0.0
        %370 = vmatpush1.msra.mxu0 0.0
        %371 = vmatprep.subr.mxu0 0.0
        %372 = vmatpush1.msra.mxu0 0.0
        %373 = vmatprep.subr.mxu0 0.0
        %374 = vmatpush1.msra.mxu0 0.0
        %375 = vmatprep.subr.mxu0 0.0
        %376 = vmatpush1.msra.mxu0 0.0
        %377 = vmatprep.subr.mxu0 0.0
        %378 = vmatpush1.msra.mxu0 0.0
        %379 = vmatprep.subr.mxu0 0.0
        %380 = vmatpush1.msra.mxu0 0.0
        %381 = vmatprep.subr.mxu0 0.0
        %382 = vmatpush1.msra.mxu0 0.0
        %383 = vmatprep.subr.mxu0 0.0
        %384 = vmatpush1.msra.mxu0 0.0
        %385 = vmatprep.subr.mxu0 0.0
        %386 = vmatpush1.msra.mxu0 0.0
        %387 = vmatprep.subr.mxu0 0.0
        %388 = vmatpush1.msra.mxu0 0.0
        %389 = vmatprep.subr.mxu0 0.0
        %390 = vmatpush1.msra.mxu0 0.0
        %391 = vmatprep.subr.mxu0 0.0
        %392 = vmatpush1.msra.mxu0 0.0
        %393 = vmatprep.subr.mxu0 0.0
        %394 = vmatpush1.msra.mxu0 0.0
        %395 = vmatprep.mubr.f32.mxu0 0.0
        %396 = vmatmul.mubr.f32.gmra.mrb[0].mxu0 %v320
        %v397 = vpop.f32.mrb[0].mxu0
        %v398 = vadd.f32 0.0, %v397
        %v399 = vpop.f32.mrb[0].mxu0
        %400 = vmatprep.mubr.f32.mxu0 0.0
        %401 = vmatmul.mubr.f32.gmra.mrb[0].mxu0 %v323
        %v402 = vpop.f32.mrb[0].mxu0
        %v403 = vadd.f32 0.0, %v402
        %v404 = vpop.f32.mrb[0].mxu0
        %405 = vmatprep.mubr.f32.mxu0 0.0
        %406 = vmatmul.mubr.f32.gmra.mrb[0].mxu0 %v326
        %v407 = vpop.f32.mrb[0].mxu0
        %v408 = vadd.f32 0.0, %v407
        %v409 = vpop.f32.mrb[0].mxu0
        %410 = vmatprep.mubr.f32.mxu0 0.0
        %411 = vmatmul.mubr.f32.gmra.mrb[0].mxu0 %v329
        %v412 = vpop.f32.mrb[0].mxu0
        %v413 = vadd.f32 0.0, %v412
        %v414 = vpop.f32.mrb[0].mxu0
        %415 = vdwg.mxu0
        %416 = vmatprep.subr.mxu0 0.0
        %417 = vmatpush1.msra.mxu0 %v287
        %418 = vmatprep.subr.mxu0 0.0
        %419 = vmatpush1.msra.mxu0 %v292
        %420 = vmatprep.subr.mxu0 0.0
        %421 = vmatpush1.msra.mxu0 0.0
        %422 = vmatprep.subr.mxu0 0.0
        %423 = vmatpush1.msra.mxu0 0.0
        %424 = vmatprep.subr.mxu0 0.0
        %425 = vmatpush1.msra.mxu0 0.0
        %426 = vmatprep.subr.mxu0 0.0
        %427 = vmatpush1.msra.mxu0 0.0
        %428 = vmatprep.subr.mxu0 0.0
        %429 = vmatpush1.msra.mxu0 0.0
        %430 = vmatprep.subr.mxu0 0.0
        %431 = vmatpush1.msra.mxu0 0.0
        %432 = vmatprep.subr.mxu0 0.0
        %433 = vmatpush1.msra.mxu0 0.0
        %434 = vmatprep.subr.mxu0 0.0
        %435 = vmatpush1.msra.mxu0 0.0
        %436 = vmatprep.subr.mxu0 0.0
        %437 = vmatpush1.msra.mxu0 0.0
        %438 = vmatprep.subr.mxu0 0.0
        %439 = vmatpush1.msra.mxu0 0.0
        %440 = vmatprep.subr.mxu0 0.0
        %441 = vmatpush1.msra.mxu0 0.0
        %442 = vmatprep.subr.mxu0 0.0
        %443 = vmatpush1.msra.mxu0 0.0
        %444 = vmatprep.subr.mxu0 0.0
        %445 = vmatpush1.msra.mxu0 0.0
        %446 = vmatprep.subr.mxu0 0.0
        %447 = vmatpush1.msra.mxu0 0.0
        %448 = vmatprep.subr.mxu0 0.0
        %449 = vmatpush1.msra.mxu0 0.0
        %450 = vmatprep.subr.mxu0 0.0
        %451 = vmatpush1.msra.mxu0 0.0
        %452 = vmatprep.subr.mxu0 0.0
        %453 = vmatpush1.msra.mxu0 0.0
        %454 = vmatprep.subr.mxu0 0.0
        %455 = vmatpush1.msra.mxu0 0.0
        %456 = vmatprep.subr.mxu0 0.0
        %457 = vmatpush1.msra.mxu0 0.0
        %458 = vmatprep.subr.mxu0 0.0
        %459 = vmatpush1.msra.mxu0 0.0
        %460 = vmatprep.subr.mxu0 0.0
        %461 = vmatpush1.msra.mxu0 0.0
        %462 = vmatprep.subr.mxu0 0.0
        %463 = vmatpush1.msra.mxu0 0.0
        %464 = vmatprep.subr.mxu0 0.0
        %465 = vmatpush1.msra.mxu0 0.0
        %466 = vmatprep.subr.mxu0 0.0
        %467 = vmatpush1.msra.mxu0 0.0
        %468 = vmatprep.subr.mxu0 0.0
        %469 = vmatpush1.msra.mxu0 0.0
        %470 = vmatprep.subr.mxu0 0.0
        %471 = vmatpush1.msra.mxu0 0.0
        %472 = vmatprep.subr.mxu0 0.0
        %473 = vmatpush1.msra.mxu0 0.0
        %474 = vmatprep.subr.mxu0 0.0
        %475 = vmatpush1.msra.mxu0 0.0
        %476 = vmatprep.subr.mxu0 0.0
        %477 = vmatpush1.msra.mxu0 0.0
        %478 = vmatprep.subr.mxu0 0.0
        %479 = vmatpush1.msra.mxu0 0.0
        %480 = vmatprep.mubr.f32.mxu0 0.0
        %481 = vmatmul.mubr.f32.gmra.mrb[0].mxu0 %v320
        %v482 = vpop.f32.mrb[0].mxu0
        %v483 = vadd.f32 0.0, %v482
        %v484 = vpop.f32.mrb[0].mxu0
        %485 = vmatprep.mubr.f32.mxu0 0.0
        %486 = vmatmul.mubr.f32.gmra.mrb[0].mxu0 %v323
        %v487 = vpop.f32.mrb[0].mxu0
        %v488 = vadd.f32 0.0, %v487
        %v489 = vpop.f32.mrb[0].mxu0
        %490 = vmatprep.mubr.f32.mxu0 0.0
        %491 = vmatmul.mubr.f32.gmra.mrb[0].mxu0 %v326
        %v492 = vpop.f32.mrb[0].mxu0
        %v493 = vadd.f32 0.0, %v492
        %v494 = vpop.f32.mrb[0].mxu0
        %495 = vmatprep.mubr.f32.mxu0 0.0
        %496 = vmatmul.mubr.f32.gmra.mrb[0].mxu0 %v329
        %v497 = vpop.f32.mrb[0].mxu0
        %v498 = vadd.f32 0.0, %v497
        %v499 = vpop.f32.mrb[0].mxu0
        %500 = vdwg.mxu0
        %501 = vmatprep.subr.mxu0 0.0
        %502 = vmatpush1.msra.mxu0 %v297
        %503 = vmatprep.subr.mxu0 0.0
        %504 = vmatpush1.msra.mxu0 %v302
        %505 = vmatprep.subr.mxu0 0.0
        %506 = vmatpush1.msra.mxu0 0.0
        %507 = vmatprep.subr.mxu0 0.0
        %508 = vmatpush1.msra.mxu0 0.0
        %509 = vmatprep.subr.mxu0 0.0
        %510 = vmatpush1.msra.mxu0 0.0
        %511 = vmatprep.subr.mxu0 0.0
        %512 = vmatpush1.msra.mxu0 0.0
        %513 = vmatprep.subr.mxu0 0.0
        %514 = vmatpush1.msra.mxu0 0.0
        %515 = vmatprep.subr.mxu0 0.0
        %516 = vmatpush1.msra.mxu0 0.0
        %517 = vmatprep.subr.mxu0 0.0
        %518 = vmatpush1.msra.mxu0 0.0
        %519 = vmatprep.subr.mxu0 0.0
        %520 = vmatpush1.msra.mxu0 0.0
        %521 = vmatprep.subr.mxu0 0.0
        %522 = vmatpush1.msra.mxu0 0.0
        %523 = vmatprep.subr.mxu0 0.0
        %524 = vmatpush1.msra.mxu0 0.0
        %525 = vmatprep.subr.mxu0 0.0
        %526 = vmatpush1.msra.mxu0 0.0
        %527 = vmatprep.subr.mxu0 0.0
        %528 = vmatpush1.msra.mxu0 0.0
        %529 = vmatprep.subr.mxu0 0.0
        %530 = vmatpush1.msra.mxu0 0.0
        %531 = vmatprep.subr.mxu0 0.0
        %532 = vmatpush1.msra.mxu0 0.0
        %533 = vmatprep.subr.mxu0 0.0
        %534 = vmatpush1.msra.mxu0 0.0
        %535 = vmatprep.subr.mxu0 0.0
        %536 = vmatpush1.msra.mxu0 0.0
        %537 = vmatprep.subr.mxu0 0.0
        %538 = vmatpush1.msra.mxu0 0.0
        %539 = vmatprep.subr.mxu0 0.0
        %540 = vmatpush1.msra.mxu0 0.0
        %541 = vmatprep.subr.mxu0 0.0
        %542 = vmatpush1.msra.mxu0 0.0
        %543 = vmatprep.subr.mxu0 0.0
        %544 = vmatpush1.msra.mxu0 0.0
        %545 = vmatprep.subr.mxu0 0.0
        %546 = vmatpush1.msra.mxu0 0.0
        %547 = vmatprep.subr.mxu0 0.0
        %548 = vmatpush1.msra.mxu0 0.0
        %549 = vmatprep.subr.mxu0 0.0
        %550 = vmatpush1.msra.mxu0 0.0
        %551 = vmatprep.subr.mxu0 0.0
        %552 = vmatpush1.msra.mxu0 0.0
        %553 = vmatprep.subr.mxu0 0.0
        %554 = vmatpush1.msra.mxu0 0.0
        %555 = vmatprep.subr.mxu0 0.0
        %556 = vmatpush1.msra.mxu0 0.0
        %557 = vmatprep.subr.mxu0 0.0
        %558 = vmatpush1.msra.mxu0 0.0
        %559 = vmatprep.subr.mxu0 0.0
        %560 = vmatpush1.msra.mxu0 0.0
        %561 = vmatprep.subr.mxu0 0.0
        %562 = vmatpush1.msra.mxu0 0.0
        %563 = vmatprep.subr.mxu0 0.0
        %564 = vmatpush1.msra.mxu0 0.0
        %565 = vmatprep.mubr.f32.mxu0 0.0
        %566 = vmatmul.mubr.f32.gmra.mrb[0].mxu0 %v320
        %v567 = vpop.f32.mrb[0].mxu0
        %v568 = vadd.f32 0.0, %v567
        %v569 = vpop.f32.mrb[0].mxu0
        %570 = vmatprep.mubr.f32.mxu0 0.0
        %571 = vmatmul.mubr.f32.gmra.mrb[0].mxu0 %v323
        %v572 = vpop.f32.mrb[0].mxu0
        %v573 = vadd.f32 0.0, %v572
        %v574 = vpop.f32.mrb[0].mxu0
        %575 = vmatprep.mubr.f32.mxu0 0.0
        %576 = vmatmul.mubr.f32.gmra.mrb[0].mxu0 %v326
        %v577 = vpop.f32.mrb[0].mxu0
        %v578 = vadd.f32 0.0, %v577
        %v579 = vpop.f32.mrb[0].mxu0
        %580 = vmatprep.mubr.f32.mxu0 0.0
        %581 = vmatmul.mubr.f32.gmra.mrb[0].mxu0 %v329
        %v582 = vpop.f32.mrb[0].mxu0
        %v583 = vadd.f32 0.0, %v582
        %v584 = vpop.f32.mrb[0].mxu0
        %585 = vdwg.mxu0
        %586 = vmatprep.subr.mxu0 0.0
        %587 = vmatpush1.msra.mxu0 %v307
        %588 = vmatprep.subr.mxu0 0.0
        %589 = vmatpush1.msra.mxu0 %v312
        %590 = vmatprep.subr.mxu0 0.0
        %591 = vmatpush1.msra.mxu0 0.0
        %592 = vmatprep.subr.mxu0 0.0
        %593 = vmatpush1.msra.mxu0 0.0
        %594 = vmatprep.subr.mxu0 0.0
        %595 = vmatpush1.msra.mxu0 0.0
        %596 = vmatprep.subr.mxu0 0.0
        %597 = vmatpush1.msra.mxu0 0.0
        %598 = vmatprep.subr.mxu0 0.0
        %599 = vmatpush1.msra.mxu0 0.0
        %600 = vmatprep.subr.mxu0 0.0
        %601 = vmatpush1.msra.mxu0 0.0
        %602 = vmatprep.subr.mxu0 0.0
        %603 = vmatpush1.msra.mxu0 0.0
        %604 = vmatprep.subr.mxu0 0.0
        %605 = vmatpush1.msra.mxu0 0.0
        %606 = vmatprep.subr.mxu0 0.0
        %607 = vmatpush1.msra.mxu0 0.0
        %608 = vmatprep.subr.mxu0 0.0
        %609 = vmatpush1.msra.mxu0 0.0
        %610 = vmatprep.subr.mxu0 0.0
        %611 = vmatpush1.msra.mxu0 0.0
        %612 = vmatprep.subr.mxu0 0.0
        %613 = vmatpush1.msra.mxu0 0.0
        %614 = vmatprep.subr.mxu0 0.0
        %615 = vmatpush1.msra.mxu0 0.0
        %616 = vmatprep.subr.mxu0 0.0
        %617 = vmatpush1.msra.mxu0 0.0
        %618 = vmatprep.subr.mxu0 0.0
        %619 = vmatpush1.msra.mxu0 0.0
        %620 = vmatprep.subr.mxu0 0.0
        %621 = vmatpush1.msra.mxu0 0.0
        %622 = vmatprep.subr.mxu0 0.0
        %623 = vmatpush1.msra.mxu0 0.0
        %624 = vmatprep.subr.mxu0 0.0
        %625 = vmatpush1.msra.mxu0 0.0
        %626 = vmatprep.subr.mxu0 0.0
        %627 = vmatpush1.msra.mxu0 0.0
        %628 = vmatprep.subr.mxu0 0.0
        %629 = vmatpush1.msra.mxu0 0.0
        %630 = vmatprep.subr.mxu0 0.0
        %631 = vmatpush1.msra.mxu0 0.0
        %632 = vmatprep.subr.mxu0 0.0
        %633 = vmatpush1.msra.mxu0 0.0
        %634 = vmatprep.subr.mxu0 0.0
        %635 = vmatpush1.msra.mxu0 0.0
        %636 = vmatprep.subr.mxu0 0.0
        %637 = vmatpush1.msra.mxu0 0.0
        %638 = vmatprep.subr.mxu0 0.0
        %639 = vmatpush1.msra.mxu0 0.0
        %640 = vmatprep.subr.mxu0 0.0
        %641 = vmatpush1.msra.mxu0 0.0
        %642 = vmatprep.subr.mxu0 0.0
        %643 = vmatpush1.msra.mxu0 0.0
        %644 = vmatprep.subr.mxu0 0.0
        %645 = vmatpush1.msra.mxu0 0.0
        %646 = vmatprep.subr.mxu0 0.0
        %647 = vmatpush1.msra.mxu0 0.0
        %648 = vmatprep.subr.mxu0 0.0
        %649 = vmatpush1.msra.mxu0 0.0
        %650 = vmatprep.mubr.f32.mxu0 0.0
        %651 = vmatmul.mubr.f32.gmra.mrb[0].mxu0 %v320
        %v652 = vpop.f32.mrb[0].mxu0
        %v653 = vadd.f32 0.0, %v652
        %v654 = vpop.f32.mrb[0].mxu0
        %655 = vmatprep.mubr.f32.mxu0 0.0
        %656 = vmatmul.mubr.f32.gmra.mrb[0].mxu0 %v323
        %v657 = vpop.f32.mrb[0].mxu0
        %v658 = vadd.f32 0.0, %v657
        %v659 = vpop.f32.mrb[0].mxu0
        %660 = vmatprep.mubr.f32.mxu0 0.0
        %661 = vmatmul.mubr.f32.gmra.mrb[0].mxu0 %v326
        %v662 = vpop.f32.mrb[0].mxu0
        %v663 = vadd.f32 0.0, %v662
        %v664 = vpop.f32.mrb[0].mxu0
        %665 = vmatprep.mubr.f32.mxu0 0.0
        %666 = vmatmul.mubr.f32.gmra.mrb[0].mxu0 %v329
        %v667 = vpop.f32.mrb[0].mxu0
        %v668 = vadd.f32 0.0, %v667
        %v669 = vpop.f32.mrb[0].mxu0
        %670 = vdwg.mxu0
        %vm671 = vcmask 261120
        %672 = vst.msk [vmem:[%s166] sm:$0xff] %vm671, %v398
        %673 = vst.msk [vmem:[%s166 + $0x8] sm:$0xff] %vm671, %v403
        %674 = vst.msk [vmem:[%s166 + $0x10] sm:$0xff] %vm671, %v408
        %675 = vst.msk [vmem:[%s166 + $0x18] sm:$0xff] %vm671, %v413
        %676 = vst.msk [vmem:[%s166 + $0x20] sm:$0xff] %vm671, %v483
        %677 = vst.msk [vmem:[%s166 + $0x28] sm:$0xff] %vm671, %v488
        %678 = vst.msk [vmem:[%s166 + $0x30] sm:$0xff] %vm671, %v493
        %679 = vst.msk [vmem:[%s166 + $0x38] sm:$0xff] %vm671, %v498
        %680 = vst.msk [vmem:[%s166 + $0x40] sm:$0xff] %vm671, %v568
        %681 = vst.msk [vmem:[%s166 + $0x48] sm:$0xff] %vm671, %v573
        %682 = vst.msk [vmem:[%s166 + $0x50] sm:$0xff] %vm671, %v578
        %683 = vst.msk [vmem:[%s166 + $0x58] sm:$0xff] %vm671, %v583
        %684 = vst.msk [vmem:[%s166 + $0x60] sm:$0xff] %vm671, %v653
        %685 = vst.msk [vmem:[%s166 + $0x68] sm:$0xff] %vm671, %v658
        %686 = vst.msk [vmem:[%s166 + $0x70] sm:$0xff] %vm671, %v663
        %687 = vst.msk [vmem:[%s166 + $0x78] sm:$0xff] %vm671, %v668
        %s688 = sand.u32 %s93, 1
        %s689 = scalar_lea.sflag [#allocation3], %s688
        %s690 = sand.u32 %s93, 1
        %s691 = smul.addr %s690, 128
        %s692 = scalar_lea.vmem [#allocation2], %s691
        // Predicated region
        $region33: #{upscale.1} parent=31 // pred_check
          %p693 = pneg %p103
        $region34: #{upscale.1} parent=31 // pred_check_branch
          %695 = sbr.rel (%p693) target = $region36
        $region35: #{upscale.1} parent=31 // pred_region
          %s696 = smul.u32 4, %s17
          %s698 = ssub.s32 2048, 2048
          %699 = vsyncadd %s689, %s698
          %s700 = smul.addr %s696, 4
          %s701 = smul.addr %s700, 128
          %s702 = scalar_lea.hbm %s3, %s701
          %s703 = sshll.u32 %s692, 4
          %s704 = int_to_ptr.vmem [resolvable:$true] %s703
          %709 = dma.vmem_to_hbm [thread:$0]  %s704, 2048, %s702, %s689, 128, 128, 8
        $region36: #{upscale.1} parent=31 // pred_fallthru
          _
      $region32: #{upscale.1} parent=5 // pred_fallthru
        _
      %p710 = scmp.le.s32.totalorder 2, %s12
      // Predicated region
      $region37: #{upscale.1} parent=5 // pred_check
        %p711 = pneg %p710
      $region38: #{upscale.1} parent=5 // pred_check_branch
        %713 = sbr.rel (%p711) target = $region40
      $region39: #{upscale.1} parent=5 // pred_region
        %s714 = ssub.s32 %s12, 2
        // Predicated region
        $region41: #{upscale.1} parent=39 // pred_check
          %p715 = pneg %p109
        $region42: #{upscale.1} parent=39 // pred_check_branch
          %717 = sbr.rel (%p715) target = $region44
        $region43: #{upscale.1} parent=39 // pred_region
          %s718 = sand.u32 %s94, 1
          %s719 = scalar_lea.sflag [#allocation3], %s718
          %s720 = sand.u32 %s94, 1
          %s721 = smul.addr %s720, 128
          %s722 = scalar_lea.vmem [#allocation2], %s721
          %723 = dma.done %s719, 2048
        $region44: #{upscale.1} parent=39 // pred_fallthru
          _
      $region40: #{upscale.1} parent=5 // pred_fallthru
        _
    $region6: #{upscale.1} parent=1 // loop_footer
      %s16 = sadd.s32 1, %s12
    $region7: #{upscale.1} parent=1 // loop_footer_branch
      %11 = sbr.rel target = $region3
    $region8: #{upscale.1} parent=1 // loop_exit
      _
    %724 = vsyncpa [#allocation3], 1
    %s725 = scalar_lea.sflag [#allocation3], 1
    %726 = vsyncpa %s725, 1

</llo_original>
